<compile_context>
chip_gen: v5e
topology: v5e:2x2
jax: 0.10.0
libtpu: 0.0.40
codegen_flags: <defaults>
</compile_context>

<pallas_src>
import jax
import jax.numpy as jnp
from jax.experimental import pallas as pl
from jax.experimental.pallas import tpu as pltpu

D_IN = 28 * 28            # 784
H1 = 256                  # already lane-dense
H2_RAW, H2 = 64, 128      # hidden padded 64 -> 128
OUT_RAW, OUT = 10, 128    # logits padded 10 -> 128

TB_MAX = 512              # max batch rows per grid step


def mlp_kernel(x_ref, w1_ref, b1_ref, w2_ref, b2_ref, w3_ref, b3_ref, o_ref):
    # Cast f32 input tile to bf16 in-kernel (feeds the MXU; accumulate stays f32).
    x = x_ref[...].astype(jnp.bfloat16)
    # fc1 + ReLU
    h1 = jnp.dot(x, w1_ref[...], preferred_element_type=jnp.float32)
    h1 = jnp.maximum(h1 + b1_ref[...], 0.0).astype(jnp.bfloat16)
    # fc2 + ReLU
    h2 = jnp.dot(h1, w2_ref[...], preferred_element_type=jnp.float32)
    h2 = jnp.maximum(h2 + b2_ref[...], 0.0).astype(jnp.bfloat16)
    # fc3 (padded logits, no activation); store bf16 (lane-dense, unmasked vst)
    out = jnp.dot(h2, w3_ref[...], preferred_element_type=jnp.float32)
    o_ref[...] = (out + b3_ref[...]).astype(o_ref.dtype)


def pack_params(w1, b1, w2, b2, w3, b3):
    """Cast weights to bf16 and zero-pad hidden/output dims to lane-dense widths."""
    w1p = w1.astype(jnp.bfloat16)                                                   # [784, 256]
    b1p = b1.astype(jnp.float32)                                                    # [1, 256]
    w2p = jnp.pad(w2, ((0, 0), (0, H2 - H2_RAW))).astype(jnp.bfloat16)              # [256, 128]
    b2p = jnp.pad(b2, ((0, 0), (0, H2 - H2_RAW))).astype(jnp.float32)               # [1, 128]
    w3p = jnp.pad(w3, ((0, H2 - H2_RAW), (0, OUT - OUT_RAW))).astype(jnp.bfloat16)  # [128, 128]
    b3p = jnp.pad(b3, ((0, 0), (0, OUT - OUT_RAW))).astype(jnp.float32)             # [1, 128]
    return w1p, b1p, w2p, b2p, w3p, b3p


def _choose_batch_tile(B):
    if B > TB_MAX:
        return TB_MAX
    # Moderate batch that would otherwise be 1 tile: split into 2 sublane-aligned
    # tiles so the "parallel" grid axis can use both TensorCores on v7x.
    if B >= 128 and B % 16 == 0:
        return B // 2
    # Single tile covering the full batch dim (block == full array dim is legal
    # even when B is not a multiple of 8).
    return B


@jax.jit
def mlp_forward(x, w1p, b1p, w2p, b2p, w3p, b3p):
    """x: [B, 784] float32. Returns [B, 10] float32 logits."""
    B = x.shape[0]
    TB = _choose_batch_tile(B)
    grid = (pl.cdiv(B, TB),)

    const = lambda shape: pl.BlockSpec(shape, lambda i: (0, 0))  # VMEM-resident weights

    out_padded = pl.pallas_call(
        mlp_kernel,
        out_shape=jax.ShapeDtypeStruct((B, OUT), jnp.bfloat16),
        grid=grid,
        in_specs=[
            pl.BlockSpec((TB, D_IN), lambda i: (i, 0)),   # x: batch-indexed, f32
            const((D_IN, H1)), const((1, H1)),            # fc1
            const((H1, H2)), const((1, H2)),              # fc2 (padded)
            const((H2, OUT)), const((1, OUT)),            # fc3 (padded)
        ],
        out_specs=pl.BlockSpec((TB, OUT), lambda i: (i, 0)),
        compiler_params=pltpu.CompilerParams(
            dimension_semantics=("parallel",),
            vmem_limit_bytes=32 << 20,
        ),
    )(x, w1p, b1p, w2p, b2p, w3p, b3p)

    # Slice off padded lanes and upcast to f32 logits.
    return out_padded[:, :OUT_RAW].astype(jnp.float32)


def init_params(key):
    # Deterministic init mimicking PyTorch's default Linear init:
    # U(-1/sqrt(fan_in), 1/sqrt(fan_in)) for weight and bias. Logical shapes
    # (pre-padding, pre-cast): w[in, out], b[1, out].
    dims = [(D_IN, H1), (H1, H2_RAW), (H2_RAW, OUT_RAW)]
    params = []
    for fan_in, fan_out in dims:
        key, kw, kb = jax.random.split(key, 3)
        bound = 1.0 / jnp.sqrt(fan_in)
        w = jax.random.uniform(kw, (fan_in, fan_out), jnp.float32, -bound, bound)
        b = jax.random.uniform(kb, (1, fan_out), jnp.float32, -bound, bound)
        params += [w, b]
    return params


def reference_forward(x, w1p, b1p, w2p, b2p, w3p, b3p):
    """Pure-JAX reference mirroring the kernel's bf16-input / f32-accumulate recipe."""
    xb = x.astype(jnp.bfloat16)
    h1 = jnp.maximum(jnp.dot(xb, w1p, preferred_element_type=jnp.float32) + b1p, 0.0)
    h1 = h1.astype(jnp.bfloat16)
    h2 = jnp.maximum(jnp.dot(h1, w2p, preferred_element_type=jnp.float32) + b2p, 0.0)
    h2 = h2.astype(jnp.bfloat16)
    out = (jnp.dot(h2, w3p, preferred_element_type=jnp.float32) + b3p).astype(jnp.bfloat16)
    return out[:, :OUT_RAW].astype(jnp.float32)
    # NOTE: bf16 rounding of x/weights (~1e-2 level) is the accepted delta vs. a
    # true f32 PyTorch Net forward.


if __name__ == "__main__":
    key = jax.random.PRNGKey(0)
    key, kx = jax.random.split(key)
    B = 8
    x = jax.random.normal(kx, (B, D_IN), jnp.float32)

    w1, b1, w2, b2, w3, b3 = init_params(key)
    packed = pack_params(w1, b1, w2, b2, w3, b3)

    out = mlp_forward(x, *packed)
    out = jax.block_until_ready(out)

    ref = reference_forward(x, *packed)
    assert out.shape == (B, OUT_RAW)
    assert jnp.allclose(out, ref, atol=1e-2, rtol=1e-2), (
        f"max abs err = {jnp.max(jnp.abs(out - ref))}"
    )
    print("KERNEL_OK")
</pallas_src>

<mosaic_0001>
module attributes {stable_mosaic.version = 11 : i64} {
  func.func @mlp_kernel(%arg0: i32, %arg1: memref<8x784xf32, #tpu.memory_space<vmem>>, %arg2: memref<784x256xbf16, #tpu.memory_space<vmem>>, %arg3: memref<1x256xf32, #tpu.memory_space<vmem>>, %arg4: memref<256x128xbf16, #tpu.memory_space<vmem>>, %arg5: memref<1x128xf32, #tpu.memory_space<vmem>>, %arg6: memref<128x128xbf16, #tpu.memory_space<vmem>>, %arg7: memref<1x128xf32, #tpu.memory_space<vmem>>, %arg8: memref<8x128xbf16, #tpu.memory_space<vmem>>) attributes {dimension_semantics = [#tpu.dimension_semantics<parallel>], iteration_bounds = array<i64: 1>, scalar_prefetch = 0 : i64, scratch_operands = 0 : i64, tpu.core_type = #tpu.core_type<tc>, window_params = [{transform_indices = @transform_0, window_bounds = array<i64: 8, 784>}, {pipeline_mode = #tpu.pipeline_mode<synchronous>, transform_indices = @transform_1, window_bounds = array<i64: 784, 256>}, {pipeline_mode = #tpu.pipeline_mode<synchronous>, transform_indices = @transform_2, window_bounds = array<i64: 1, 256>}, {pipeline_mode = #tpu.pipeline_mode<synchronous>, transform_indices = @transform_3, window_bounds = array<i64: 256, 128>}, {pipeline_mode = #tpu.pipeline_mode<synchronous>, transform_indices = @transform_4, window_bounds = array<i64: 1, 128>}, {pipeline_mode = #tpu.pipeline_mode<synchronous>, transform_indices = @transform_5, window_bounds = array<i64: 128, 128>}, {pipeline_mode = #tpu.pipeline_mode<synchronous>, transform_indices = @transform_6, window_bounds = array<i64: 1, 128>}, {transform_indices = @transform_7, window_bounds = array<i64: 8, 128>}]} {
    %c0 = arith.constant 0 : index
    %c0_0 = arith.constant 0 : index
    %0 = vector.load %arg1[%c0, %c0_0] : memref<8x784xf32, #tpu.memory_space<vmem>>, vector<8x784xf32>
    %1 = arith.truncf %0 : vector<8x784xf32> to vector<8x784xbf16>
    %c0_1 = arith.constant 0 : index
    %c0_2 = arith.constant 0 : index
    %2 = vector.load %arg2[%c0_1, %c0_2] : memref<784x256xbf16, #tpu.memory_space<vmem>>, vector<784x256xbf16>
    %cst = arith.constant dense<0.000000e+00> : vector<8x256xf32>
    %3 = tpu.matmul %1, %2, %cst {dimension_numbers = #tpu.dot_dimension_numbers<[1], [0], [0], [1], [0, 0, 1, 1], [], []>} : vector<8x784xbf16>, vector<784x256xbf16>, vector<8x256xf32> -> vector<8x256xf32>
    %c0_3 = arith.constant 0 : index
    %c0_4 = arith.constant 0 : index
    %4 = vector.load %arg3[%c0_3, %c0_4] : memref<1x256xf32, #tpu.memory_space<vmem>>, vector<1x256xf32>
    %5 = vector.broadcast %4 : vector<1x256xf32> to vector<8x256xf32>
    %6 = arith.addf %3, %5 : vector<8x256xf32>
    %cst_5 = arith.constant 0.000000e+00 : f32
    %7 = vector.broadcast %cst_5 : f32 to vector<8x256xf32>
    %8 = arith.maximumf %6, %7 : vector<8x256xf32>
    %9 = arith.truncf %8 : vector<8x256xf32> to vector<8x256xbf16>
    %c0_6 = arith.constant 0 : index
    %c0_7 = arith.constant 0 : index
    %10 = vector.load %arg4[%c0_6, %c0_7] : memref<256x128xbf16, #tpu.memory_space<vmem>>, vector<256x128xbf16>
    %cst_8 = arith.constant dense<0.000000e+00> : vector<8x128xf32>
    %11 = tpu.matmul %9, %10, %cst_8 {dimension_numbers = #tpu.dot_dimension_numbers<[1], [0], [0], [1], [0, 0, 1, 1], [], []>} : vector<8x256xbf16>, vector<256x128xbf16>, vector<8x128xf32> -> vector<8x128xf32>
    %c0_9 = arith.constant 0 : index
    %c0_10 = arith.constant 0 : index
    %12 = vector.load %arg5[%c0_9, %c0_10] : memref<1x128xf32, #tpu.memory_space<vmem>>, vector<1x128xf32>
    %13 = vector.broadcast %12 : vector<1x128xf32> to vector<8x128xf32>
    %14 = arith.addf %11, %13 : vector<8x128xf32>
    %cst_11 = arith.constant 0.000000e+00 : f32
    %15 = vector.broadcast %cst_11 : f32 to vector<8x128xf32>
    %16 = arith.maximumf %14, %15 : vector<8x128xf32>
    %17 = arith.truncf %16 : vector<8x128xf32> to vector<8x128xbf16>
    %c0_12 = arith.constant 0 : index
    %c0_13 = arith.constant 0 : index
    %18 = vector.load %arg6[%c0_12, %c0_13] : memref<128x128xbf16, #tpu.memory_space<vmem>>, vector<128x128xbf16>
    %cst_14 = arith.constant dense<0.000000e+00> : vector<8x128xf32>
    %19 = tpu.matmul %17, %18, %cst_14 {dimension_numbers = #tpu.dot_dimension_numbers<[1], [0], [0], [1], [0, 0, 1, 1], [], []>} : vector<8x128xbf16>, vector<128x128xbf16>, vector<8x128xf32> -> vector<8x128xf32>
    %c0_15 = arith.constant 0 : index
    %c0_16 = arith.constant 0 : index
    %20 = vector.load %arg7[%c0_15, %c0_16] : memref<1x128xf32, #tpu.memory_space<vmem>>, vector<1x128xf32>
    %21 = vector.broadcast %20 : vector<1x128xf32> to vector<8x128xf32>
    %22 = arith.addf %19, %21 : vector<8x128xf32>
    %23 = arith.truncf %22 : vector<8x128xf32> to vector<8x128xbf16>
    %c0_17 = arith.constant 0 : index
    %c0_18 = arith.constant 0 : index
    %24 = vector.load %arg8[%c0_17, %c0_18] : memref<8x128xbf16, #tpu.memory_space<vmem>>, vector<8x128xbf16>
    tpu.vector_store %arg8[%c0_17, %c0_18], %23 {strides = array<i32>} : memref<8x128xbf16, #tpu.memory_space<vmem>>, vector<8x128xbf16>,
    return
  }
  func.func @transform_0(%arg0: i32) -> (i32, i32) {
    %c0_i32 = arith.constant 0 : i32
    %c0_i32_0 = arith.constant 0 : i32
    return %arg0, %c0_i32 : i32, i32
  }
  func.func @transform_1(%arg0: i32) -> (i32, i32) {
    %c0_i32 = arith.constant 0 : i32
    %c0_i32_0 = arith.constant 0 : i32
    %c0_i32_1 = arith.constant 0 : i32
    return %c0_i32, %c0_i32_0 : i32, i32
  }
  func.func @transform_2(%arg0: i32) -> (i32, i32) {
    %c0_i32 = arith.constant 0 : i32
    %c0_i32_0 = arith.constant 0 : i32
    %c0_i32_1 = arith.constant 0 : i32
    return %c0_i32, %c0_i32_0 : i32, i32
  }
  func.func @transform_3(%arg0: i32) -> (i32, i32) {
    %c0_i32 = arith.constant 0 : i32
    %c0_i32_0 = arith.constant 0 : i32
    %c0_i32_1 = arith.constant 0 : i32
    return %c0_i32, %c0_i32_0 : i32, i32
  }
  func.func @transform_4(%arg0: i32) -> (i32, i32) {
    %c0_i32 = arith.constant 0 : i32
    %c0_i32_0 = arith.constant 0 : i32
    %c0_i32_1 = arith.constant 0 : i32
    return %c0_i32, %c0_i32_0 : i32, i32
  }
  func.func @transform_5(%arg0: i32) -> (i32, i32) {
    %c0_i32 = arith.constant 0 : i32
    %c0_i32_0 = arith.constant 0 : i32
    %c0_i32_1 = arith.constant 0 : i32
    return %c0_i32, %c0_i32_0 : i32, i32
  }
  func.func @transform_6(%arg0: i32) -> (i32, i32) {
    %c0_i32 = arith.constant 0 : i32
    %c0_i32_0 = arith.constant 0 : i32
    %c0_i32_1 = arith.constant 0 : i32
    return %c0_i32, %c0_i32_0 : i32, i32
  }
  func.func @transform_7(%arg0: i32) -> (i32, i32) {
    %c0_i32 = arith.constant 0 : i32
    %c0_i32_0 = arith.constant 0 : i32
    return %arg0, %c0_i32 : i32, i32
  }
}

</mosaic_0001>

<llo_original>
// kernel: mlp_forward.1
$region0: #{mlp_forward.1}
  #allocation0 [shape = 'u32[]', space=smem, size = 0x4, offset = 0x4, fixed_abs, tag = 'smem constant byte address 0x4 - core index']
  #allocation1 [shape = 'u32[72,128]{1,0:T(1,128)}', space=vmem, size = 0x9000, scoped, tag = 'internal scratch']
  %s0 = inlined_call_operand.hbm [shape: f32[8,784], index: 0, kind: input, shape index: {}]
  %s1 = inlined_call_operand.hbm [shape: bf16[784,256], index: 1, kind: input, shape index: {}]
  %s2 = inlined_call_operand.hbm [shape: f32[1,256], index: 2, kind: input, shape index: {}]
  %s3 = inlined_call_operand.hbm [shape: bf16[256,128], index: 3, kind: input, shape index: {}]
  %s4 = inlined_call_operand.vmem [shape: f32[1,128], index: 4, kind: input, shape index: {}]
  %s5 = inlined_call_operand.hbm [shape: bf16[128,128], index: 5, kind: input, shape index: {}]
  %s6 = inlined_call_operand.vmem [shape: f32[1,128], index: 6, kind: input, shape index: {}]
  %s7 = inlined_call_operand.vmem [shape: bf16[8,128], index: 7, kind: output, shape index: {}]
  %s8 = sld [smem:[#allocation0]]
  $region58: #{mlp_forward.1} parent=0
    _
  %s10 = ssub.s32 1, %s8
  %s11 = scalar_select 0, %s10, %s8
  $region1: #{mlp_forward.1} parent=0
    #allocation2 [shape = 'u8[28672]{0}', space=vmem, size = 0x7000, scoped, tag = 'input window, operand 0, single buffered']
    #allocation3 [shape = 's32[1]{0}', space=sflag, size = 0x4, scoped, tag = 'scoped memory for mlp_forward.1']
    #allocation4 [shape = 'u8[401408]{0}', space=vmem, size = 0x62000, scoped, tag = 'input window, operand 1, single buffered']
    #allocation5 [shape = 's32[1]{0}', space=sflag, size = 0x4, scoped, tag = 'scoped memory for mlp_forward.1']
    #allocation6 [shape = 'u8[1024]{0}', space=vmem, size = 0x400, scoped, tag = 'input window, operand 2, single buffered']
    #allocation7 [shape = 'u8[65536]{0}', space=vmem, size = 0x10000, scoped, tag = 'input window, operand 3, single buffered']
    #allocation8 [shape = 's32[1]{0}', space=sflag, size = 0x4, scoped, tag = 'scoped memory for mlp_forward.1']
    #allocation9 [shape = 'u8[32768]{0}', space=vmem, size = 0x8000, scoped, tag = 'input window, operand 5, single buffered']
    %12 = vsyncpa [#allocation3], 0
    %13 = vsyncpa [#allocation5], 0
    %14 = vsyncpa [#allocation8], 0
    // Predicated region
    $region2: #{mlp_forward.1} parent=1 // pred_check
      _
    $region3: #{mlp_forward.1} parent=1 // pred_check_branch
      %16 = sbr.rel (0) target = $region5
    $region4: #{mlp_forward.1} parent=1 // pred_region
      %18 = vsyncadd [#allocation3], 0
      %s20 = sshll.u32 %s0, 4
      %s21 = int_to_ptr.hbm [resolvable:$true] %s20
      %s22 = sshll.u32 [#allocation2], 4
      %s23 = int_to_ptr.vmem [resolvable:$true] %s22
      %25 = dma.hbm_to_vmem [thread:$0]  %s21, 896, %s23, [#allocation3]
    $region5: #{mlp_forward.1} parent=1 // pred_fallthru
      _
    // Predicated region
    $region6: #{mlp_forward.1} parent=1 // pred_check
      _
    $region7: #{mlp_forward.1} parent=1 // pred_check_branch
      %27 = sbr.rel (0) target = $region9
    $region8: #{mlp_forward.1} parent=1 // pred_region
      %29 = vsyncadd [#allocation5], 0
      %s30 = sshll.u32 %s1, 4
      %s31 = int_to_ptr.hbm [resolvable:$true] %s30
      %s32 = sshll.u32 [#allocation4], 4
      %s33 = int_to_ptr.vmem [resolvable:$true] %s32
      %38 = dma.hbm_to_vmem [thread:$0]  %s31, 12544, %s33, [#allocation5], 128, 128, 8
    $region9: #{mlp_forward.1} parent=1 // pred_fallthru
      _
    // Predicated region
    $region10: #{mlp_forward.1} parent=1 // pred_check
      _
    $region11: #{mlp_forward.1} parent=1 // pred_check_branch
      %40 = sbr.rel (0) target = $region13
    $region12: #{mlp_forward.1} parent=1 // pred_region
      %42 = vsyncadd [#allocation5], 0
      %s44 = sshll.u32 %s2, 4
      %s45 = int_to_ptr.hbm [resolvable:$true] %s44
      %s46 = sshll.u32 [#allocation6], 4
      %s47 = int_to_ptr.vmem [resolvable:$true] %s46
      %49 = dma.hbm_to_vmem [thread:$0]  %s45, 32, %s47, [#allocation5]
    $region13: #{mlp_forward.1} parent=1 // pred_fallthru
      _
    // Predicated region
    $region14: #{mlp_forward.1} parent=1 // pred_check
      _
    $region15: #{mlp_forward.1} parent=1 // pred_check_branch
      %51 = sbr.rel (0) target = $region17
    $region16: #{mlp_forward.1} parent=1 // pred_region
      %53 = vsyncadd [#allocation8], 0
      %s54 = sshll.u32 %s3, 4
      %s55 = int_to_ptr.hbm [resolvable:$true] %s54
      %s56 = sshll.u32 [#allocation7], 4
      %s57 = int_to_ptr.vmem [resolvable:$true] %s56
      %62 = dma.hbm_to_vmem [thread:$0]  %s55, 2048, %s57, [#allocation8], 64, 64, 4
    $region17: #{mlp_forward.1} parent=1 // pred_fallthru
      _
    // Predicated region
    $region18: #{mlp_forward.1} parent=1 // pred_check
      _
    $region19: #{mlp_forward.1} parent=1 // pred_check_branch
      %64 = sbr.rel (0) target = $region21
    $region20: #{mlp_forward.1} parent=1 // pred_region
      _
    $region21: #{mlp_forward.1} parent=1 // pred_fallthru
      _
    // Predicated region
    $region22: #{mlp_forward.1} parent=1 // pred_check
      _
    $region23: #{mlp_forward.1} parent=1 // pred_check_branch
      %66 = sbr.rel (0) target = $region25
    $region24: #{mlp_forward.1} parent=1 // pred_region
      %68 = vsyncadd [#allocation8], 0
      %s69 = sshll.u32 %s5, 4
      %s70 = int_to_ptr.hbm [resolvable:$true] %s69
      %s71 = sshll.u32 [#allocation9], 4
      %s72 = int_to_ptr.vmem [resolvable:$true] %s71
      %77 = dma.hbm_to_vmem [thread:$0]  %s70, 1024, %s72, [#allocation8], 64, 64, 4
    $region25: #{mlp_forward.1} parent=1 // pred_fallthru
      _
    // Predicated region
    $region26: #{mlp_forward.1} parent=1 // pred_check
      _
    $region27: #{mlp_forward.1} parent=1 // pred_check_branch
      %79 = sbr.rel (0) target = $region29
    $region28: #{mlp_forward.1} parent=1 // pred_region
      _
    $region29: #{mlp_forward.1} parent=1 // pred_fallthru
      _
    // Predicated region
    $region30: #{mlp_forward.1} parent=1 // pred_check
      _
    $region31: #{mlp_forward.1} parent=1 // pred_check_branch
      %81 = sbr.rel (0) target = $region33
    $region32: #{mlp_forward.1} parent=1 // pred_region
      %83 = dma.done [#allocation3], 896
    $region33: #{mlp_forward.1} parent=1 // pred_fallthru
      _
    // Predicated region
    $region34: #{mlp_forward.1} parent=1 // pred_check
      _
    $region35: #{mlp_forward.1} parent=1 // pred_check_branch
      %85 = sbr.rel (0) target = $region37
    $region36: #{mlp_forward.1} parent=1 // pred_region
      %87 = dma.done [#allocation5], 12544
    $region37: #{mlp_forward.1} parent=1 // pred_fallthru
      _
    // Predicated region
    $region38: #{mlp_forward.1} parent=1 // pred_check
      _
    $region39: #{mlp_forward.1} parent=1 // pred_check_branch
      %89 = sbr.rel (0) target = $region41
    $region40: #{mlp_forward.1} parent=1 // pred_region
      %91 = dma.done [#allocation5], 32
    $region41: #{mlp_forward.1} parent=1 // pred_fallthru
      _
    // Predicated region
    $region42: #{mlp_forward.1} parent=1 // pred_check
      _
    $region43: #{mlp_forward.1} parent=1 // pred_check_branch
      %93 = sbr.rel (0) target = $region45
    $region44: #{mlp_forward.1} parent=1 // pred_region
      %95 = dma.done [#allocation8], 2048
    $region45: #{mlp_forward.1} parent=1 // pred_fallthru
      _
    // Predicated region
    $region46: #{mlp_forward.1} parent=1 // pred_check
      _
    $region47: #{mlp_forward.1} parent=1 // pred_check_branch
      %97 = sbr.rel (0) target = $region49
    $region48: #{mlp_forward.1} parent=1 // pred_region
      %99 = dma.done [#allocation8], 1024
    $region49: #{mlp_forward.1} parent=1 // pred_fallthru
      _
    %v101 = vld [vmem:[#allocation2] sm:$0xff]
    %v102 = vld [vmem:[#allocation2 + $0x8] sm:$0xff]
    %v103 = vld [vmem:[#allocation2 + $0x10] sm:$0xff]
    %v104 = vld [vmem:[#allocation2 + $0x18] sm:$0xff]
    %v105 = vld [vmem:[#allocation2 + $0x20] sm:$0xff]
    %v106 = vld [vmem:[#allocation2 + $0x28] sm:$0xff]
    %v107 = vld [vmem:[#allocation2 + $0x30] sm:$0xff]
    %v108 = vpack.c.bf16 %v101, %v101
    %v109 = vpack.c.bf16 %v102, %v102
    %v110 = vpack.c.bf16 %v103, %v103
    %v111 = vpack.c.bf16 %v104, %v104
    %v112 = vpack.c.bf16 %v105, %v105
    %v113 = vpack.c.bf16 %v106, %v106
    %v114 = vpack.c.bf16 %v107, %v107
    %v115 = vld [vmem:[#allocation4] sm:$0xff]
    %v116 = vld [vmem:[#allocation4 + $0x8] sm:$0xff]
    %v117 = vld [vmem:[#allocation4 + $0x10] sm:$0xff]
    %v118 = vld [vmem:[#allocation4 + $0x18] sm:$0xff]
    %v119 = vld [vmem:[#allocation4 + $0x20] sm:$0xff]
    %v120 = vld [vmem:[#allocation4 + $0x28] sm:$0xff]
    %v121 = vld [vmem:[#allocation4 + $0x30] sm:$0xff]
    %v122 = vld [vmem:[#allocation4 + $0x38] sm:$0xff]
    %v123 = vld [vmem:[#allocation4 + $0x40] sm:$0xff]
    %v124 = vld [vmem:[#allocation4 + $0x48] sm:$0xff]
    %v125 = vld [vmem:[#allocation4 + $0x50] sm:$0xff]
    %v126 = vld [vmem:[#allocation4 + $0x58] sm:$0xff]
    %v127 = vld [vmem:[#allocation4 + $0x60] sm:$0xff]
    %v128 = vld [vmem:[#allocation4 + $0x68] sm:$0xff]
    %v129 = vld [vmem:[#allocation4 + $0x70] sm:$0xff]
    %v130 = vld [vmem:[#allocation4 + $0x78] sm:$0xff]
    %v131 = vld [vmem:[#allocation4 + $0x80] sm:$0xff]
    %v132 = vld [vmem:[#allocation4 + $0x88] sm:$0xff]
    %v133 = vld [vmem:[#allocation4 + $0x90] sm:$0xff]
    %v134 = vld [vmem:[#allocation4 + $0x98] sm:$0xff]
    %v135 = vld [vmem:[#allocation4 + $0xa0] sm:$0xff]
    %v136 = vld [vmem:[#allocation4 + $0xa8] sm:$0xff]
    %v137 = vld [vmem:[#allocation4 + $0xb0] sm:$0xff]
    %v138 = vld [vmem:[#allocation4 + $0xb8] sm:$0xff]
    %v139 = vld [vmem:[#allocation4 + $0xc0] sm:$0xff]
    %v140 = vld [vmem:[#allocation4 + $0xc8] sm:$0xff]
    %v141 = vld [vmem:[#allocation4 + $0xd0] sm:$0xff]
    %v142 = vld [vmem:[#allocation4 + $0xd8] sm:$0xff]
    %v143 = vld [vmem:[#allocation4 + $0xe0] sm:$0xff]
    %v144 = vld [vmem:[#allocation4 + $0xe8] sm:$0xff]
    %v145 = vld [vmem:[#allocation4 + $0xf0] sm:$0xff]
    %v146 = vld [vmem:[#allocation4 + $0xf8] sm:$0xff]
    %v147 = vld [vmem:[#allocation4 + $0x100] sm:$0xff]
    %v148 = vld [vmem:[#allocation4 + $0x108] sm:$0xff]
    %v149 = vld [vmem:[#allocation4 + $0x110] sm:$0xff]
    %v150 = vld [vmem:[#allocation4 + $0x118] sm:$0xff]
    %v151 = vld [vmem:[#allocation4 + $0x120] sm:$0xff]
    %v152 = vld [vmem:[#allocation4 + $0x128] sm:$0xff]
    %v153 = vld [vmem:[#allocation4 + $0x130] sm:$0xff]
    %v154 = vld [vmem:[#allocation4 + $0x138] sm:$0xff]
    %v155 = vld [vmem:[#allocation4 + $0x140] sm:$0xff]
    %v156 = vld [vmem:[#allocation4 + $0x148] sm:$0xff]
    %v157 = vld [vmem:[#allocation4 + $0x150] sm:$0xff]
    %v158 = vld [vmem:[#allocation4 + $0x158] sm:$0xff]
    %v159 = vld [vmem:[#allocation4 + $0x160] sm:$0xff]
    %v160 = vld [vmem:[#allocation4 + $0x168] sm:$0xff]
    %v161 = vld [vmem:[#allocation4 + $0x170] sm:$0xff]
    %v162 = vld [vmem:[#allocation4 + $0x178] sm:$0xff]
    %v163 = vld [vmem:[#allocation4 + $0x180] sm:$0xff]
    %v164 = vld [vmem:[#allocation4 + $0x188] sm:$0xff]
    %v165 = vld [vmem:[#allocation4 + $0x190] sm:$0xff]
    %v166 = vld [vmem:[#allocation4 + $0x198] sm:$0xff]
    %v167 = vld [vmem:[#allocation4 + $0x1a0] sm:$0xff]
    %v168 = vld [vmem:[#allocation4 + $0x1a8] sm:$0xff]
    %v169 = vld [vmem:[#allocation4 + $0x1b0] sm:$0xff]
    %v170 = vld [vmem:[#allocation4 + $0x1b8] sm:$0xff]
    %v171 = vld [vmem:[#allocation4 + $0x1c0] sm:$0xff]
    %v172 = vld [vmem:[#allocation4 + $0x1c8] sm:$0xff]
    %v173 = vld [vmem:[#allocation4 + $0x1d0] sm:$0xff]
    %v174 = vld [vmem:[#allocation4 + $0x1d8] sm:$0xff]
    %v175 = vld [vmem:[#allocation4 + $0x1e0] sm:$0xff]
    %v176 = vld [vmem:[#allocation4 + $0x1e8] sm:$0xff]
    %v177 = vld [vmem:[#allocation4 + $0x1f0] sm:$0xff]
    %v178 = vld [vmem:[#allocation4 + $0x1f8] sm:$0xff]
    %v179 = vld [vmem:[#allocation4 + $0x200] sm:$0xff]
    %v180 = vld [vmem:[#allocation4 + $0x208] sm:$0xff]
    %v181 = vld [vmem:[#allocation4 + $0x210] sm:$0xff]
    %v182 = vld [vmem:[#allocation4 + $0x218] sm:$0xff]
    %v183 = vld [vmem:[#allocation4 + $0x220] sm:$0xff]
    %v184 = vld [vmem:[#allocation4 + $0x228] sm:$0xff]
    %v185 = vld [vmem:[#allocation4 + $0x230] sm:$0xff]
    %v186 = vld [vmem:[#allocation4 + $0x238] sm:$0xff]
    %v187 = vld [vmem:[#allocation4 + $0x240] sm:$0xff]
    %v188 = vld [vmem:[#allocation4 + $0x248] sm:$0xff]
    %v189 = vld [vmem:[#allocation4 + $0x250] sm:$0xff]
    %v190 = vld [vmem:[#allocation4 + $0x258] sm:$0xff]
    %v191 = vld [vmem:[#allocation4 + $0x260] sm:$0xff]
    %v192 = vld [vmem:[#allocation4 + $0x268] sm:$0xff]
    %v193 = vld [vmem:[#allocation4 + $0x270] sm:$0xff]
    %v194 = vld [vmem:[#allocation4 + $0x278] sm:$0xff]
    %v195 = vld [vmem:[#allocation4 + $0x280] sm:$0xff]
    %v196 = vld [vmem:[#allocation4 + $0x288] sm:$0xff]
    %v197 = vld [vmem:[#allocation4 + $0x290] sm:$0xff]
    %v198 = vld [vmem:[#allocation4 + $0x298] sm:$0xff]
    %v199 = vld [vmem:[#allocation4 + $0x2a0] sm:$0xff]
    %v200 = vld [vmem:[#allocation4 + $0x2a8] sm:$0xff]
    %v201 = vld [vmem:[#allocation4 + $0x2b0] sm:$0xff]
    %v202 = vld [vmem:[#allocation4 + $0x2b8] sm:$0xff]
    %v203 = vld [vmem:[#allocation4 + $0x2c0] sm:$0xff]
    %v204 = vld [vmem:[#allocation4 + $0x2c8] sm:$0xff]
    %v205 = vld [vmem:[#allocation4 + $0x2d0] sm:$0xff]
    %v206 = vld [vmem:[#allocation4 + $0x2d8] sm:$0xff]
    %v207 = vld [vmem:[#allocation4 + $0x2e0] sm:$0xff]
    %v208 = vld [vmem:[#allocation4 + $0x2e8] sm:$0xff]
    %v209 = vld [vmem:[#allocation4 + $0x2f0] sm:$0xff]
    %v210 = vld [vmem:[#allocation4 + $0x2f8] sm:$0xff]
    %v211 = vld [vmem:[#allocation4 + $0x300] sm:$0xff]
    %v212 = vld [vmem:[#allocation4 + $0x308] sm:$0xff]
    %v213 = vld [vmem:[#allocation6] sm:$0x3]
    %v215 = vperm.slane %v213, 0
    %v216 = vperm.slane %v213, 1
    %v317 = vunpack.c.l.b16 %v115
    %v318 = vunpack.c.h.b16 %v115
    %v319 = vunpack.c.l.b16 %v116
    %v320 = vunpack.c.h.b16 %v116
    %v321 = vunpack.c.l.b16 %v117
    %v322 = vunpack.c.h.b16 %v117
    %v323 = vunpack.c.l.b16 %v118
    %v324 = vunpack.c.h.b16 %v118
    %v325 = vunpack.c.l.b16 %v119
    %v326 = vunpack.c.h.b16 %v119
    %v327 = vunpack.c.l.b16 %v120
    %v328 = vunpack.c.h.b16 %v120
    %v329 = vunpack.c.l.b16 %v121
    %v330 = vunpack.c.h.b16 %v121
    %v331 = vunpack.c.l.b16 %v122
    %v332 = vunpack.c.h.b16 %v122
    %v333 = vunpack.c.l.b16 %v123
    %v334 = vunpack.c.h.b16 %v123
    %v335 = vunpack.c.l.b16 %v124
    %v336 = vunpack.c.h.b16 %v124
    %v337 = vunpack.c.l.b16 %v125
    %v338 = vunpack.c.h.b16 %v125
    %v339 = vunpack.c.l.b16 %v126
    %v340 = vunpack.c.h.b16 %v126
    %v341 = vunpack.c.l.b16 %v127
    %v342 = vunpack.c.h.b16 %v127
    %v343 = vunpack.c.l.b16 %v128
    %v344 = vunpack.c.h.b16 %v128
    %v345 = vunpack.c.l.b16 %v129
    %v346 = vunpack.c.h.b16 %v129
    %v347 = vunpack.c.l.b16 %v130
    %v348 = vunpack.c.h.b16 %v130
    %v349 = vunpack.c.l.b16 %v131
    %v350 = vunpack.c.h.b16 %v131
    %v351 = vunpack.c.l.b16 %v132
    %v352 = vunpack.c.h.b16 %v132
    %v353 = vunpack.c.l.b16 %v133
    %v354 = vunpack.c.h.b16 %v133
    %v355 = vunpack.c.l.b16 %v134
    %v356 = vunpack.c.h.b16 %v134
    %v357 = vunpack.c.l.b16 %v135
    %v358 = vunpack.c.h.b16 %v135
    %v359 = vunpack.c.l.b16 %v136
    %v360 = vunpack.c.h.b16 %v136
    %v361 = vunpack.c.l.b16 %v137
    %v362 = vunpack.c.h.b16 %v137
    %v363 = vunpack.c.l.b16 %v138
    %v364 = vunpack.c.h.b16 %v138
    %v365 = vunpack.c.l.b16 %v139
    %v366 = vunpack.c.h.b16 %v139
    %v367 = vunpack.c.l.b16 %v140
    %v368 = vunpack.c.h.b16 %v140
    %v369 = vunpack.c.l.b16 %v141
    %v370 = vunpack.c.h.b16 %v141
    %v371 = vunpack.c.l.b16 %v142
    %v372 = vunpack.c.h.b16 %v142
    %v373 = vunpack.c.l.b16 %v143
    %v374 = vunpack.c.h.b16 %v143
    %v375 = vunpack.c.l.b16 %v144
    %v376 = vunpack.c.h.b16 %v144
    %v377 = vunpack.c.l.b16 %v145
    %v378 = vunpack.c.h.b16 %v145
    %v379 = vunpack.c.l.b16 %v146
    %v380 = vunpack.c.h.b16 %v146
    %v381 = vunpack.c.l.b16 %v147
    %v382 = vunpack.c.h.b16 %v147
    %v383 = vunpack.c.l.b16 %v148
    %v384 = vunpack.c.h.b16 %v148
    %v385 = vunpack.c.l.b16 %v149
    %v386 = vunpack.c.h.b16 %v149
    %v387 = vunpack.c.l.b16 %v150
    %v388 = vunpack.c.h.b16 %v150
    %v389 = vunpack.c.l.b16 %v151
    %v390 = vunpack.c.h.b16 %v151
    %v391 = vunpack.c.l.b16 %v152
    %v392 = vunpack.c.h.b16 %v152
    %v393 = vunpack.c.l.b16 %v153
    %v394 = vunpack.c.h.b16 %v153
    %v395 = vunpack.c.l.b16 %v154
    %v396 = vunpack.c.h.b16 %v154
    %v397 = vunpack.c.l.b16 %v155
    %v398 = vunpack.c.h.b16 %v155
    %v399 = vunpack.c.l.b16 %v156
    %v400 = vunpack.c.h.b16 %v156
    %v401 = vunpack.c.l.b16 %v157
    %v402 = vunpack.c.h.b16 %v157
    %v403 = vunpack.c.l.b16 %v158
    %v404 = vunpack.c.h.b16 %v158
    %v405 = vunpack.c.l.b16 %v159
    %v406 = vunpack.c.h.b16 %v159
    %v407 = vunpack.c.l.b16 %v160
    %v408 = vunpack.c.h.b16 %v160
    %v409 = vunpack.c.l.b16 %v161
    %v410 = vunpack.c.h.b16 %v161
    %v411 = vunpack.c.l.b16 %v162
    %v412 = vunpack.c.h.b16 %v162
    %v413 = vunpack.c.l.b16 %v163
    %v414 = vunpack.c.h.b16 %v163
    %v415 = vunpack.c.l.b16 %v164
    %v416 = vunpack.c.h.b16 %v164
    %v417 = vunpack.c.l.b16 %v165
    %v418 = vunpack.c.h.b16 %v165
    %v419 = vunpack.c.l.b16 %v166
    %v420 = vunpack.c.h.b16 %v166
    %v421 = vunpack.c.l.b16 %v167
    %v422 = vunpack.c.h.b16 %v167
    %v423 = vunpack.c.l.b16 %v168
    %v424 = vunpack.c.h.b16 %v168
    %v425 = vunpack.c.l.b16 %v169
    %v426 = vunpack.c.h.b16 %v169
    %v427 = vunpack.c.l.b16 %v170
    %v428 = vunpack.c.h.b16 %v170
    %v429 = vunpack.c.l.b16 %v171
    %v430 = vunpack.c.h.b16 %v171
    %v431 = vunpack.c.l.b16 %v172
    %v432 = vunpack.c.h.b16 %v172
    %v433 = vunpack.c.l.b16 %v173
    %v434 = vunpack.c.h.b16 %v173
    %v435 = vunpack.c.l.b16 %v174
    %v436 = vunpack.c.h.b16 %v174
    %v437 = vunpack.c.l.b16 %v175
    %v438 = vunpack.c.h.b16 %v175
    %v439 = vunpack.c.l.b16 %v176
    %v440 = vunpack.c.h.b16 %v176
    %v441 = vunpack.c.l.b16 %v177
    %v442 = vunpack.c.h.b16 %v177
    %v443 = vunpack.c.l.b16 %v178
    %v444 = vunpack.c.h.b16 %v178
    %v445 = vunpack.c.l.b16 %v179
    %v446 = vunpack.c.h.b16 %v179
    %v447 = vunpack.c.l.b16 %v180
    %v448 = vunpack.c.h.b16 %v180
    %v449 = vunpack.c.l.b16 %v181
    %v450 = vunpack.c.h.b16 %v181
    %v451 = vunpack.c.l.b16 %v182
    %v452 = vunpack.c.h.b16 %v182
    %v453 = vunpack.c.l.b16 %v183
    %v454 = vunpack.c.h.b16 %v183
    %v455 = vunpack.c.l.b16 %v184
    %v456 = vunpack.c.h.b16 %v184
    %v457 = vunpack.c.l.b16 %v185
    %v458 = vunpack.c.h.b16 %v185
    %v459 = vunpack.c.l.b16 %v186
    %v460 = vunpack.c.h.b16 %v186
    %v461 = vunpack.c.l.b16 %v187
    %v462 = vunpack.c.h.b16 %v187
    %v463 = vunpack.c.l.b16 %v188
    %v464 = vunpack.c.h.b16 %v188
    %v465 = vunpack.c.l.b16 %v189
    %v466 = vunpack.c.h.b16 %v189
    %v467 = vunpack.c.l.b16 %v190
    %v468 = vunpack.c.h.b16 %v190
    %v469 = vunpack.c.l.b16 %v191
    %v470 = vunpack.c.h.b16 %v191
    %v471 = vunpack.c.l.b16 %v192
    %v472 = vunpack.c.h.b16 %v192
    %v473 = vunpack.c.l.b16 %v193
    %v474 = vunpack.c.h.b16 %v193
    %v475 = vunpack.c.l.b16 %v194
    %v476 = vunpack.c.h.b16 %v194
    %v477 = vunpack.c.l.b16 %v195
    %v478 = vunpack.c.h.b16 %v195
    %v479 = vunpack.c.l.b16 %v196
    %v480 = vunpack.c.h.b16 %v196
    %v481 = vunpack.c.l.b16 %v197
    %v482 = vunpack.c.h.b16 %v197
    %v483 = vunpack.c.l.b16 %v198
    %v484 = vunpack.c.h.b16 %v198
    %v485 = vunpack.c.l.b16 %v199
    %v486 = vunpack.c.h.b16 %v199
    %v487 = vunpack.c.l.b16 %v200
    %v488 = vunpack.c.h.b16 %v200
    %v489 = vunpack.c.l.b16 %v201
    %v490 = vunpack.c.h.b16 %v201
    %v491 = vunpack.c.l.b16 %v202
    %v492 = vunpack.c.h.b16 %v202
    %v493 = vunpack.c.l.b16 %v203
    %v494 = vunpack.c.h.b16 %v203
    %v495 = vunpack.c.l.b16 %v204
    %v496 = vunpack.c.h.b16 %v204
    %v497 = vunpack.c.l.b16 %v205
    %v498 = vunpack.c.h.b16 %v205
    %v499 = vunpack.c.l.b16 %v206
    %v500 = vunpack.c.h.b16 %v206
    %v501 = vunpack.c.l.b16 %v207
    %v502 = vunpack.c.h.b16 %v207
    %v503 = vunpack.c.l.b16 %v208
    %v504 = vunpack.c.h.b16 %v208
    %v505 = vunpack.c.l.b16 %v209
    %v506 = vunpack.c.h.b16 %v209
    %v507 = vunpack.c.l.b16 %v210
    %v508 = vunpack.c.h.b16 %v210
    %v509 = vunpack.c.l.b16 %v211
    %v510 = vunpack.c.h.b16 %v211
    %v511 = vunpack.c.l.b16 %v212
    %v512 = vunpack.c.h.b16 %v212
    %v513 = vpack.c.b16 %v319, %v317
    %v514 = vpack.c.b16 %v320, %v318
    %v515 = vpack.c.b16 %v323, %v321
    %v516 = vpack.c.b16 %v324, %v322
    %v517 = vpack.c.b16 %v327, %v325
    %v518 = vpack.c.b16 %v328, %v326
    %v519 = vpack.c.b16 %v331, %v329
    %v520 = vpack.c.b16 %v332, %v330
    %v521 = vpack.c.b16 %v335, %v333
    %v522 = vpack.c.b16 %v336, %v334
    %v523 = vpack.c.b16 %v339, %v337
    %v524 = vpack.c.b16 %v340, %v338
    %v525 = vpack.c.b16 %v343, %v341
    %v526 = vpack.c.b16 %v344, %v342
    %v527 = vpack.c.b16 %v347, %v345
    %v528 = vpack.c.b16 %v348, %v346
    %v529 = vpack.c.b16 %v351, %v349
    %v530 = vpack.c.b16 %v352, %v350
    %v531 = vpack.c.b16 %v355, %v353
    %v532 = vpack.c.b16 %v356, %v354
    %v533 = vpack.c.b16 %v359, %v357
    %v534 = vpack.c.b16 %v360, %v358
    %v535 = vpack.c.b16 %v363, %v361
    %v536 = vpack.c.b16 %v364, %v362
    %v537 = vpack.c.b16 %v367, %v365
    %v538 = vpack.c.b16 %v368, %v366
    %v539 = vpack.c.b16 %v371, %v369
    %v540 = vpack.c.b16 %v372, %v370
    %v541 = vpack.c.b16 %v375, %v373
    %v542 = vpack.c.b16 %v376, %v374
    %v543 = vpack.c.b16 %v379, %v377
    %v544 = vpack.c.b16 %v380, %v378
    %v545 = vpack.c.b16 %v383, %v381
    %v546 = vpack.c.b16 %v384, %v382
    %v547 = vpack.c.b16 %v387, %v385
    %v548 = vpack.c.b16 %v388, %v386
    %v549 = vpack.c.b16 %v391, %v389
    %v550 = vpack.c.b16 %v392, %v390
    %v551 = vpack.c.b16 %v395, %v393
    %v552 = vpack.c.b16 %v396, %v394
    %v553 = vpack.c.b16 %v399, %v397
    %v554 = vpack.c.b16 %v400, %v398
    %v555 = vpack.c.b16 %v403, %v401
    %v556 = vpack.c.b16 %v404, %v402
    %v557 = vpack.c.b16 %v407, %v405
    %v558 = vpack.c.b16 %v408, %v406
    %v559 = vpack.c.b16 %v411, %v409
    %v560 = vpack.c.b16 %v412, %v410
    %v561 = vpack.c.b16 %v415, %v413
    %v562 = vpack.c.b16 %v416, %v414
    %v563 = vpack.c.b16 %v419, %v417
    %v564 = vpack.c.b16 %v420, %v418
    %v565 = vpack.c.b16 %v423, %v421
    %v566 = vpack.c.b16 %v424, %v422
    %v567 = vpack.c.b16 %v427, %v425
    %v568 = vpack.c.b16 %v428, %v426
    %v569 = vpack.c.b16 %v431, %v429
    %v570 = vpack.c.b16 %v432, %v430
    %v571 = vpack.c.b16 %v435, %v433
    %v572 = vpack.c.b16 %v436, %v434
    %v573 = vpack.c.b16 %v439, %v437
    %v574 = vpack.c.b16 %v440, %v438
    %v575 = vpack.c.b16 %v443, %v441
    %v576 = vpack.c.b16 %v444, %v442
    %v577 = vpack.c.b16 %v447, %v445
    %v578 = vpack.c.b16 %v448, %v446
    %v579 = vpack.c.b16 %v451, %v449
    %v580 = vpack.c.b16 %v452, %v450
    %v581 = vpack.c.b16 %v455, %v453
    %v582 = vpack.c.b16 %v456, %v454
    %v583 = vpack.c.b16 %v459, %v457
    %v584 = vpack.c.b16 %v460, %v458
    %v585 = vpack.c.b16 %v463, %v461
    %v586 = vpack.c.b16 %v464, %v462
    %v587 = vpack.c.b16 %v467, %v465
    %v588 = vpack.c.b16 %v468, %v466
    %v589 = vpack.c.b16 %v471, %v469
    %v590 = vpack.c.b16 %v472, %v470
    %v591 = vpack.c.b16 %v475, %v473
    %v592 = vpack.c.b16 %v476, %v474
    %v593 = vpack.c.b16 %v479, %v477
    %v594 = vpack.c.b16 %v480, %v478
    %v595 = vpack.c.b16 %v483, %v481
    %v596 = vpack.c.b16 %v484, %v482
    %v597 = vpack.c.b16 %v487, %v485
    %v598 = vpack.c.b16 %v488, %v486
    %v599 = vpack.c.b16 %v491, %v489
    %v600 = vpack.c.b16 %v492, %v490
    %v601 = vpack.c.b16 %v495, %v493
    %v602 = vpack.c.b16 %v496, %v494
    %v603 = vpack.c.b16 %v499, %v497
    %v604 = vpack.c.b16 %v500, %v498
    %v605 = vpack.c.b16 %v503, %v501
    %v606 = vpack.c.b16 %v504, %v502
    %v607 = vpack.c.b16 %v507, %v505
    %v608 = vpack.c.b16 %v508, %v506
    %v609 = vpack.c.b16 %v511, %v509
    %v610 = vpack.c.b16 %v512, %v510
    %vm709 = vcmask 130048
    %v711 = vsel %vm709, %v114, 0
    %713 = vmatpush.bf16.msra.mxu0 %v527
    %714 = vmatpush.bf16.msra.mxu0 %v525
    %715 = vmatpush.bf16.msra.mxu0 %v523
    %716 = vmatpush.bf16.msra.mxu0 %v521
    %717 = vmatpush.bf16.msra.mxu0 %v519
    %718 = vmatpush.bf16.msra.mxu0 %v517
    %719 = vmatpush.bf16.msra.mxu0 %v515
    %720 = vmatpush.bf16.msra.mxu0 %v513
    %721 = vmatmul.bf16.gmra.mxu0 %v108
    %v722 = vpop.f32.mrf.mxu0
    %v723 = vadd.f32 %v215, %v722
    %v724 = vpop.f32.mrf.mxu0
    %725 = vdwg.mxu0
    %726 = vmatpush.bf16.msra.mxu0 %v543
    %727 = vmatpush.bf16.msra.mxu0 %v541
    %728 = vmatpush.bf16.msra.mxu0 %v539
    %729 = vmatpush.bf16.msra.mxu0 %v537
    %730 = vmatpush.bf16.msra.mxu0 %v535
    %731 = vmatpush.bf16.msra.mxu0 %v533
    %732 = vmatpush.bf16.msra.mxu0 %v531
    %733 = vmatpush.bf16.msra.mxu0 %v529
    %734 = vmatmul.bf16.gmra.mxu0 %v109
    %v735 = vpop.f32.mrf.mxu0
    %v736 = vadd.f32 %v723, %v735
    %v737 = vpop.f32.mrf.mxu0
    %738 = vdwg.mxu0
    %739 = vmatpush.bf16.msra.mxu0 %v559
    %740 = vmatpush.bf16.msra.mxu0 %v557
    %741 = vmatpush.bf16.msra.mxu0 %v555
    %742 = vmatpush.bf16.msra.mxu0 %v553
    %743 = vmatpush.bf16.msra.mxu0 %v551
    %744 = vmatpush.bf16.msra.mxu0 %v549
    %745 = vmatpush.bf16.msra.mxu0 %v547
    %746 = vmatpush.bf16.msra.mxu0 %v545
    %747 = vmatmul.bf16.gmra.mxu0 %v110
    %v748 = vpop.f32.mrf.mxu0
    %v749 = vadd.f32 %v736, %v748
    %v750 = vpop.f32.mrf.mxu0
    %751 = vdwg.mxu0
    %752 = vmatpush.bf16.msra.mxu0 %v575
    %753 = vmatpush.bf16.msra.mxu0 %v573
    %754 = vmatpush.bf16.msra.mxu0 %v571
    %755 = vmatpush.bf16.msra.mxu0 %v569
    %756 = vmatpush.bf16.msra.mxu0 %v567
    %757 = vmatpush.bf16.msra.mxu0 %v565
    %758 = vmatpush.bf16.msra.mxu0 %v563
    %759 = vmatpush.bf16.msra.mxu0 %v561
    %760 = vmatmul.bf16.gmra.mxu0 %v111
    %v761 = vpop.f32.mrf.mxu0
    %v762 = vadd.f32 %v749, %v761
    %v763 = vpop.f32.mrf.mxu0
    %764 = vdwg.mxu0
    %765 = vmatpush.bf16.msra.mxu0 %v591
    %766 = vmatpush.bf16.msra.mxu0 %v589
    %767 = vmatpush.bf16.msra.mxu0 %v587
    %768 = vmatpush.bf16.msra.mxu0 %v585
    %769 = vmatpush.bf16.msra.mxu0 %v583
    %770 = vmatpush.bf16.msra.mxu0 %v581
    %771 = vmatpush.bf16.msra.mxu0 %v579
    %772 = vmatpush.bf16.msra.mxu0 %v577
    %773 = vmatmul.bf16.gmra.mxu0 %v112
    %v774 = vpop.f32.mrf.mxu0
    %v775 = vadd.f32 %v762, %v774
    %v776 = vpop.f32.mrf.mxu0
    %777 = vdwg.mxu0
    %778 = vmatpush.bf16.msra.mxu0 %v607
    %779 = vmatpush.bf16.msra.mxu0 %v605
    %780 = vmatpush.bf16.msra.mxu0 %v603
    %781 = vmatpush.bf16.msra.mxu0 %v601
    %782 = vmatpush.bf16.msra.mxu0 %v599
    %783 = vmatpush.bf16.msra.mxu0 %v597
    %784 = vmatpush.bf16.msra.mxu0 %v595
    %785 = vmatpush.bf16.msra.mxu0 %v593
    %786 = vmatmul.bf16.gmra.mxu0 %v113
    %v787 = vpop.f32.mrf.mxu0
    %v788 = vadd.f32 %v775, %v787
    %v789 = vpop.f32.mrf.mxu0
    %790 = vdwg.mxu0
    %791 = vmatpush.bf16.msra.mxu0 0
    %792 = vmatpush.bf16.msra.mxu0 0
    %793 = vmatpush.bf16.msra.mxu0 0
    %794 = vmatpush.bf16.msra.mxu0 0
    %795 = vmatpush.bf16.msra.mxu0 0
    %796 = vmatpush.bf16.msra.mxu0 0
    %797 = vmatpush.bf16.msra.mxu0 0
    %798 = vmatpush.bf16.msra.mxu0 %v609
    %799 = vmatmul.bf16.gmra.mxu0 %v711
    %v800 = vpop.f32.mrf.mxu0
    %v801 = vadd.f32 %v788, %v800
    %v802 = vpop.f32.mrf.mxu0
    %803 = vdwg.mxu0
    %804 = vmatpush.bf16.msra.mxu0 %v528
    %805 = vmatpush.bf16.msra.mxu0 %v526
    %806 = vmatpush.bf16.msra.mxu0 %v524
    %807 = vmatpush.bf16.msra.mxu0 %v522
    %808 = vmatpush.bf16.msra.mxu0 %v520
    %809 = vmatpush.bf16.msra.mxu0 %v518
    %810 = vmatpush.bf16.msra.mxu0 %v516
    %811 = vmatpush.bf16.msra.mxu0 %v514
    %812 = vmatmul.bf16.gmra.mxu0 %v108
    %v813 = vpop.f32.mrf.mxu0
    %v814 = vadd.f32 %v216, %v813
    %v815 = vpop.f32.mrf.mxu0
    %816 = vdwg.mxu0
    %817 = vmatpush.bf16.msra.mxu0 %v544
    %818 = vmatpush.bf16.msra.mxu0 %v542
    %819 = vmatpush.bf16.msra.mxu0 %v540
    %820 = vmatpush.bf16.msra.mxu0 %v538
    %821 = vmatpush.bf16.msra.mxu0 %v536
    %822 = vmatpush.bf16.msra.mxu0 %v534
    %823 = vmatpush.bf16.msra.mxu0 %v532
    %824 = vmatpush.bf16.msra.mxu0 %v530
    %825 = vmatmul.bf16.gmra.mxu0 %v109
    %v826 = vpop.f32.mrf.mxu0
    %v827 = vadd.f32 %v814, %v826
    %v828 = vpop.f32.mrf.mxu0
    %829 = vdwg.mxu0
    %830 = vmatpush.bf16.msra.mxu0 %v560
    %831 = vmatpush.bf16.msra.mxu0 %v558
    %832 = vmatpush.bf16.msra.mxu0 %v556
    %833 = vmatpush.bf16.msra.mxu0 %v554
    %834 = vmatpush.bf16.msra.mxu0 %v552
    %835 = vmatpush.bf16.msra.mxu0 %v550
    %836 = vmatpush.bf16.msra.mxu0 %v548
    %837 = vmatpush.bf16.msra.mxu0 %v546
    %838 = vmatmul.bf16.gmra.mxu0 %v110
    %v839 = vpop.f32.mrf.mxu0
    %v840 = vadd.f32 %v827, %v839
    %v841 = vpop.f32.mrf.mxu0
    %842 = vdwg.mxu0
    %843 = vmatpush.bf16.msra.mxu0 %v576
    %844 = vmatpush.bf16.msra.mxu0 %v574
    %845 = vmatpush.bf16.msra.mxu0 %v572
    %846 = vmatpush.bf16.msra.mxu0 %v570
    %847 = vmatpush.bf16.msra.mxu0 %v568
    %848 = vmatpush.bf16.msra.mxu0 %v566
    %849 = vmatpush.bf16.msra.mxu0 %v564
    %850 = vmatpush.bf16.msra.mxu0 %v562
    %851 = vmatmul.bf16.gmra.mxu0 %v111
    %v852 = vpop.f32.mrf.mxu0
    %v853 = vadd.f32 %v840, %v852
    %v854 = vpop.f32.mrf.mxu0
    %855 = vdwg.mxu0
    %856 = vmatpush.bf16.msra.mxu0 %v592
    %857 = vmatpush.bf16.msra.mxu0 %v590
    %858 = vmatpush.bf16.msra.mxu0 %v588
    %859 = vmatpush.bf16.msra.mxu0 %v586
    %860 = vmatpush.bf16.msra.mxu0 %v584
    %861 = vmatpush.bf16.msra.mxu0 %v582
    %862 = vmatpush.bf16.msra.mxu0 %v580
    %863 = vmatpush.bf16.msra.mxu0 %v578
    %864 = vmatmul.bf16.gmra.mxu0 %v112
    %v865 = vpop.f32.mrf.mxu0
    %v866 = vadd.f32 %v853, %v865
    %v867 = vpop.f32.mrf.mxu0
    %868 = vdwg.mxu0
    %869 = vmatpush.bf16.msra.mxu0 %v608
    %870 = vmatpush.bf16.msra.mxu0 %v606
    %871 = vmatpush.bf16.msra.mxu0 %v604
    %872 = vmatpush.bf16.msra.mxu0 %v602
    %873 = vmatpush.bf16.msra.mxu0 %v600
    %874 = vmatpush.bf16.msra.mxu0 %v598
    %875 = vmatpush.bf16.msra.mxu0 %v596
    %876 = vmatpush.bf16.msra.mxu0 %v594
    %877 = vmatmul.bf16.gmra.mxu0 %v113
    %v878 = vpop.f32.mrf.mxu0
    %v879 = vadd.f32 %v866, %v878
    %v880 = vpop.f32.mrf.mxu0
    %881 = vdwg.mxu0
    %882 = vmatpush.bf16.msra.mxu0 0
    %883 = vmatpush.bf16.msra.mxu0 0
    %884 = vmatpush.bf16.msra.mxu0 0
    %885 = vmatpush.bf16.msra.mxu0 0
    %886 = vmatpush.bf16.msra.mxu0 0
    %887 = vmatpush.bf16.msra.mxu0 0
    %888 = vmatpush.bf16.msra.mxu0 0
    %889 = vmatpush.bf16.msra.mxu0 %v610
    %890 = vmatmul.bf16.gmra.mxu0 %v711
    %v891 = vpop.f32.mrf.mxu0
    %v892 = vadd.f32 %v879, %v891
    %v893 = vpop.f32.mrf.mxu0
    %894 = vdwg.mxu0
    %v895 = vmax.f32 %v801, 0.0
    %v896 = vmax.f32 %v892, 0.0
    %v897 = vpack.c.bf16 %v895, %v895
    %v898 = vpack.c.bf16 %v896, %v896
    %v899 = vld [vmem:[#allocation7] sm:$0xf]
    %v900 = vld [vmem:[#allocation7 + $0x4] sm:$0xf]
    %v901 = vld [vmem:[#allocation7 + $0x8] sm:$0xf]
    %v902 = vld [vmem:[#allocation7 + $0xc] sm:$0xf]
    %v903 = vld [vmem:[#allocation7 + $0x10] sm:$0xf]
    %v904 = vld [vmem:[#allocation7 + $0x14] sm:$0xf]
    %v905 = vld [vmem:[#allocation7 + $0x18] sm:$0xf]
    %v906 = vld [vmem:[#allocation7 + $0x1c] sm:$0xf]
    %v907 = vld [vmem:[#allocation7 + $0x20] sm:$0xf]
    %v908 = vld [vmem:[#allocation7 + $0x24] sm:$0xf]
    %v909 = vld [vmem:[#allocation7 + $0x28] sm:$0xf]
    %v910 = vld [vmem:[#allocation7 + $0x2c] sm:$0xf]
    %v911 = vld [vmem:[#allocation7 + $0x30] sm:$0xf]
    %v912 = vld [vmem:[#allocation7 + $0x34] sm:$0xf]
    %v913 = vld [vmem:[#allocation7 + $0x38] sm:$0xf]
    %v914 = vld [vmem:[#allocation7 + $0x3c] sm:$0xf]
    %v915 = vld [vmem:[#allocation7 + $0x40] sm:$0xf]
    %v916 = vld [vmem:[#allocation7 + $0x44] sm:$0xf]
    %v917 = vld [vmem:[#allocation7 + $0x48] sm:$0xf]
    %v918 = vld [vmem:[#allocation7 + $0x4c] sm:$0xf]
    %v919 = vld [vmem:[#allocation7 + $0x50] sm:$0xf]
    %v920 = vld [vmem:[#allocation7 + $0x54] sm:$0xf]
    %v921 = vld [vmem:[#allocation7 + $0x58] sm:$0xf]
    %v922 = vld [vmem:[#allocation7 + $0x5c] sm:$0xf]
    %v923 = vld [vmem:[#allocation7 + $0x60] sm:$0xf]
    %v924 = vld [vmem:[#allocation7 + $0x64] sm:$0xf]
    %v925 = vld [vmem:[#allocation7 + $0x68] sm:$0xf]
    %v926 = vld [vmem:[#allocation7 + $0x6c] sm:$0xf]
    %v927 = vld [vmem:[#allocation7 + $0x70] sm:$0xf]
    %v928 = vld [vmem:[#allocation7 + $0x74] sm:$0xf]
    %v929 = vld [vmem:[#allocation7 + $0x78] sm:$0xf]
    %v930 = vld [vmem:[#allocation7 + $0x7c] sm:$0xf]
    %v931 = vld [vmem:[%s4] sm:$0x1]
    %v933 = vperm.slane %v931, 0
    %v967 = vunpack.c.l.b16 %v899
    %v968 = vunpack.c.l.b16 %v900
    %v969 = vunpack.c.l.b16 %v901
    %v970 = vunpack.c.l.b16 %v902
    %v971 = vunpack.c.l.b16 %v903
    %v972 = vunpack.c.l.b16 %v904
    %v973 = vunpack.c.l.b16 %v905
    %v974 = vunpack.c.l.b16 %v906
    %v975 = vunpack.c.l.b16 %v907
    %v976 = vunpack.c.l.b16 %v908
    %v977 = vunpack.c.l.b16 %v909
    %v978 = vunpack.c.l.b16 %v910
    %v979 = vunpack.c.l.b16 %v911
    %v980 = vunpack.c.l.b16 %v912
    %v981 = vunpack.c.l.b16 %v913
    %v982 = vunpack.c.l.b16 %v914
    %v983 = vunpack.c.l.b16 %v915
    %v984 = vunpack.c.l.b16 %v916
    %v985 = vunpack.c.l.b16 %v917
    %v986 = vunpack.c.l.b16 %v918
    %v987 = vunpack.c.l.b16 %v919
    %v988 = vunpack.c.l.b16 %v920
    %v989 = vunpack.c.l.b16 %v921
    %v990 = vunpack.c.l.b16 %v922
    %v991 = vunpack.c.l.b16 %v923
    %v992 = vunpack.c.l.b16 %v924
    %v993 = vunpack.c.l.b16 %v925
    %v994 = vunpack.c.l.b16 %v926
    %v995 = vunpack.c.l.b16 %v927
    %v996 = vunpack.c.l.b16 %v928
    %v997 = vunpack.c.l.b16 %v929
    %v998 = vunpack.c.l.b16 %v930
    %v999 = vpack.c.b16 %v968, %v967
    %v1000 = vpack.c.b16 %v970, %v969
    %v1001 = vpack.c.b16 %v972, %v971
    %v1002 = vpack.c.b16 %v974, %v973
    %v1003 = vpack.c.b16 %v976, %v975
    %v1004 = vpack.c.b16 %v978, %v977
    %v1005 = vpack.c.b16 %v980, %v979
    %v1006 = vpack.c.b16 %v982, %v981
    %v1007 = vpack.c.b16 %v984, %v983
    %v1008 = vpack.c.b16 %v986, %v985
    %v1009 = vpack.c.b16 %v988, %v987
    %v1010 = vpack.c.b16 %v990, %v989
    %v1011 = vpack.c.b16 %v992, %v991
    %v1012 = vpack.c.b16 %v994, %v993
    %v1013 = vpack.c.b16 %v996, %v995
    %v1014 = vpack.c.b16 %v998, %v997
    %1031 = vmatpush.bf16.msra.mxu0 %v1006
    %1032 = vmatpush.bf16.msra.mxu0 %v1005
    %1033 = vmatpush.bf16.msra.mxu0 %v1004
    %1034 = vmatpush.bf16.msra.mxu0 %v1003
    %1035 = vmatpush.bf16.msra.mxu0 %v1002
    %1036 = vmatpush.bf16.msra.mxu0 %v1001
    %1037 = vmatpush.bf16.msra.mxu0 %v1000
    %1038 = vmatpush.bf16.msra.mxu0 %v999
    %1039 = vmatmul.bf16.gmra.mxu0 %v897
    %v1040 = vpop.f32.mrf.mxu0
    %v1041 = vadd.f32 %v933, %v1040
    %v1042 = vpop.f32.mrf.mxu0
    %1043 = vdwg.mxu0
    %1044 = vmatpush.bf16.msra.mxu0 %v1014
    %1045 = vmatpush.bf16.msra.mxu0 %v1013
    %1046 = vmatpush.bf16.msra.mxu0 %v1012
    %1047 = vmatpush.bf16.msra.mxu0 %v1011
    %1048 = vmatpush.bf16.msra.mxu0 %v1010
    %1049 = vmatpush.bf16.msra.mxu0 %v1009
    %1050 = vmatpush.bf16.msra.mxu0 %v1008
    %1051 = vmatpush.bf16.msra.mxu0 %v1007
    %1052 = vmatmul.bf16.gmra.mxu0 %v898
    %v1053 = vpop.f32.mrf.mxu0
    %v1054 = vadd.f32 %v1041, %v1053
    %v1055 = vpop.f32.mrf.mxu0
    %1056 = vdwg.mxu0
    %v1057 = vmax.f32 %v1054, 0.0
    %v1058 = vpack.c.bf16 %v1057, %v1057
    %v1059 = vld [vmem:[#allocation9] sm:$0xf]
    %v1060 = vld [vmem:[#allocation9 + $0x4] sm:$0xf]
    %v1061 = vld [vmem:[#allocation9 + $0x8] sm:$0xf]
    %v1062 = vld [vmem:[#allocation9 + $0xc] sm:$0xf]
    %v1063 = vld [vmem:[#allocation9 + $0x10] sm:$0xf]
    %v1064 = vld [vmem:[#allocation9 + $0x14] sm:$0xf]
    %v1065 = vld [vmem:[#allocation9 + $0x18] sm:$0xf]
    %v1066 = vld [vmem:[#allocation9 + $0x1c] sm:$0xf]
    %v1067 = vld [vmem:[#allocation9 + $0x20] sm:$0xf]
    %v1068 = vld [vmem:[#allocation9 + $0x24] sm:$0xf]
    %v1069 = vld [vmem:[#allocation9 + $0x28] sm:$0xf]
    %v1070 = vld [vmem:[#allocation9 + $0x2c] sm:$0xf]
    %v1071 = vld [vmem:[#allocation9 + $0x30] sm:$0xf]
    %v1072 = vld [vmem:[#allocation9 + $0x34] sm:$0xf]
    %v1073 = vld [vmem:[#allocation9 + $0x38] sm:$0xf]
    %v1074 = vld [vmem:[#allocation9 + $0x3c] sm:$0xf]
    %v1075 = vld [vmem:[%s6] sm:$0x1]
    %v1077 = vperm.slane %v1075, 0
    %v1095 = vunpack.c.l.b16 %v1059
    %v1096 = vunpack.c.l.b16 %v1060
    %v1097 = vunpack.c.l.b16 %v1061
    %v1098 = vunpack.c.l.b16 %v1062
    %v1099 = vunpack.c.l.b16 %v1063
    %v1100 = vunpack.c.l.b16 %v1064
    %v1101 = vunpack.c.l.b16 %v1065
    %v1102 = vunpack.c.l.b16 %v1066
    %v1103 = vunpack.c.l.b16 %v1067
    %v1104 = vunpack.c.l.b16 %v1068
    %v1105 = vunpack.c.l.b16 %v1069
    %v1106 = vunpack.c.l.b16 %v1070
    %v1107 = vunpack.c.l.b16 %v1071
    %v1108 = vunpack.c.l.b16 %v1072
    %v1109 = vunpack.c.l.b16 %v1073
    %v1110 = vunpack.c.l.b16 %v1074
    %v1111 = vpack.c.b16 %v1096, %v1095
    %v1112 = vpack.c.b16 %v1098, %v1097
    %v1113 = vpack.c.b16 %v1100, %v1099
    %v1114 = vpack.c.b16 %v1102, %v1101
    %v1115 = vpack.c.b16 %v1104, %v1103
    %v1116 = vpack.c.b16 %v1106, %v1105
    %v1117 = vpack.c.b16 %v1108, %v1107
    %v1118 = vpack.c.b16 %v1110, %v1109
    %1127 = vmatpush.bf16.msra.mxu0 %v1118
    %1128 = vmatpush.bf16.msra.mxu0 %v1117
    %1129 = vmatpush.bf16.msra.mxu0 %v1116
    %1130 = vmatpush.bf16.msra.mxu0 %v1115
    %1131 = vmatpush.bf16.msra.mxu0 %v1114
    %1132 = vmatpush.bf16.msra.mxu0 %v1113
    %1133 = vmatpush.bf16.msra.mxu0 %v1112
    %1134 = vmatpush.bf16.msra.mxu0 %v1111
    %1135 = vmatmul.bf16.gmra.mxu0 %v1058
    %v1136 = vpop.f32.mrf.mxu0
    %v1137 = vadd.f32 %v1077, %v1136
    %v1138 = vpop.f32.mrf.mxu0
    %1139 = vdwg.mxu0
    %v1140 = vpack.c.bf16 %v1137, %v1137
    %1141 = vst [vmem:[%s7] sm:$0xf] %v1140
    // Predicated region
    $region50: #{mlp_forward.1} parent=1 // pred_check
      _
    $region51: #{mlp_forward.1} parent=1 // pred_check_branch
      %1143 = sbr.rel (0) target = $region53
    $region52: #{mlp_forward.1} parent=1 // pred_region
      _
    $region53: #{mlp_forward.1} parent=1 // pred_fallthru
      _
    // Predicated region
    $region54: #{mlp_forward.1} parent=1 // pred_check
      _
    $region55: #{mlp_forward.1} parent=1 // pred_check_branch
      %1145 = sbr.rel (0) target = $region57
    $region56: #{mlp_forward.1} parent=1 // pred_region
      _
    $region57: #{mlp_forward.1} parent=1 // pred_fallthru
      _
    %1146 = vsyncpa [#allocation3], 1
    %1147 = vsyncpa [#allocation5], 1
    %1148 = vsyncpa [#allocation8], 1

</llo_original>
